<compile_context>
chip_gen: v6e
topology: v6e:2x2x1
jax: 0.10.0
libtpu: 0.0.40
codegen_flags: <defaults>
</compile_context>

<pallas_src>
import functools

import jax
import jax.numpy as jnp
from jax.experimental import pallas as pl
from jax.experimental.pallas import tpu as pltpu


def _xavier_uniform(key, shape):
    # Matches torch.nn.init.xavier_uniform_ on a 2-D (num_embeddings, dim) weight.
    fan_in, fan_out = shape
    bound = (6.0 / (fan_in + fan_out)) ** 0.5
    return jax.random.uniform(key, shape, jnp.float32, -bound, bound)


def _round_up(a, b):
    return (a + b - 1) // b * b


def _make_fused_kernel(vocab_offsets, vocab_sizes, v_pad, num_fields):
    """One combined one-hot (tm, V_pad) -> one bf16 MXU dot -> one lane-dense store."""

    def kernel(idx_ref, table_ref, out_ref):
        tm = idx_ref.shape[0]
        col = jax.lax.broadcasted_iota(jnp.int32, (tm, v_pad), 1)      # (tm, V_pad)
        acc = None
        for i in range(num_fields):
            # (tm, 1) sublane-major slice; clamp per field so dirty indices
            # cannot alias into an adjacent field's vocab block.
            ids = idx_ref[:, i:i + 1]
            ids = jnp.clip(ids, 0, vocab_sizes[i] - 1) + vocab_offsets[i]
            hit = ids == col                                           # (tm, V_pad) bool
            acc = hit if acc is None else (acc | hit)
        onehot = acc.astype(jnp.bfloat16)                              # exact 0/1 in bf16
        # (tm, V_pad) bf16 x (V_pad, D_pad) bf16 -> f32: block-diagonal table
        # makes this exactly the concatenated per-field embedding rows.
        out_ref[...] = jnp.dot(onehot, table_ref[...],
                               preferred_element_type=jnp.float32).astype(out_ref.dtype)

    return kernel


def build_stacked_table(tables):
    """Pack per-field tables into one block-diagonal (V_pad, D_pad) bf16 operand.

    Built ONCE (device-side) at setup time; pass the result into the jitted
    forward.  Columns are zero-padded to a multiple of 128 so output tiles are
    lane-dense (unmasked full-width stores).
    """
    vocabs = [int(t.shape[0]) for t in tables]
    dims = [int(t.shape[1]) for t in tables]
    total_vocab = sum(vocabs)
    total_dim = sum(dims)
    v_pad = max(128, _round_up(total_vocab, 128))   # MXU-friendly K dimension
    d_pad = max(128, _round_up(total_dim, 128))     # lane-dense output width

    big = jnp.zeros((v_pad, d_pad), jnp.bfloat16)
    voff, doff = 0, 0
    vocab_offsets, vocab_sizes = [], []
    for t, v, d in zip(tables, vocabs, dims):
        big = big.at[voff:voff + v, doff:doff + d].set(
            jnp.asarray(t).astype(jnp.bfloat16))
        vocab_offsets.append(voff)
        vocab_sizes.append(v)
        voff += v
        doff += d
    return big, tuple(vocab_offsets), tuple(vocab_sizes), v_pad, total_dim, d_pad


@functools.partial(
    jax.jit,
    static_argnames=("vocab_offsets", "vocab_sizes", "v_pad", "total_dim",
                     "d_pad", "tm"))
def link_feature_embedding(x, stacked_table, *, vocab_offsets, vocab_sizes,
                           v_pad, total_dim, d_pad, tm=512):
    """x: (B, S, F) int32; stacked_table: (V_pad, D_pad) bf16 from build_stacked_table."""
    B, S, F = x.shape
    N = B * S

    # Tile size: capped at 512 (>= ~85% of HBM roofline; half the temporaries
    # of 1024), multiple of 8, never larger than padded N, and small enough to
    # give >= 2 grid iterations so the "parallel" axis shards on v7x megacore.
    tm = max(8, min(int(tm), _round_up(N, 8)))
    if N > 8:
        tm = min(tm, max(8, _round_up((N + 1) // 2, 8)))
    n_pad = _round_up(N, tm)

    x_flat = x.reshape(N, F).astype(jnp.int32)
    if n_pad != N:
        # Pad the tail tile with index 0 (clamped/valid); rows sliced off below.
        x_flat = jnp.pad(x_flat, ((0, n_pad - N), (0, 0)))

    kernel = _make_fused_kernel(vocab_offsets, vocab_sizes, v_pad, F)

    # Explicit VMEM budget: single-buffered bf16 table + double-buffered
    # idx/out tiles + (tm, V_pad) iota / bool-acc / bf16 one-hot temporaries.
    vmem_bytes = (
        v_pad * d_pad * 2            # bf16 table, single buffer
        + 2 * tm * F * 4             # idx tiles (double buffered)
        + 2 * tm * d_pad * 4         # f32 output tiles (double buffered)
        + tm * v_pad * 8             # iota(i32) + bool acc + bf16 one-hot
    )
    vmem_limit = int(min(60 * 2**20, max(16 * 2**20, 2 * vmem_bytes)))

    in_specs = [
        pl.BlockSpec((tm, F), lambda i: (i, 0)),                 # index tile
        pl.BlockSpec((v_pad, d_pad), lambda i: (0, 0),
                     pipeline_mode=pl.Buffered(1)),              # resident table
    ]
    out_spec = pl.BlockSpec((tm, d_pad), lambda i: (i, 0))       # lane-dense tile

    out_flat = pl.pallas_call(
        kernel,
        out_shape=jax.ShapeDtypeStruct((n_pad, d_pad), jnp.float32),
        grid_spec=pltpu.PrefetchScalarGridSpec(
            num_scalar_prefetch=0,
            grid=(n_pad // tm,),
            in_specs=in_specs,
            out_specs=out_spec,
        ),
        compiler_params=pltpu.CompilerParams(
            dimension_semantics=("parallel",),
            vmem_limit_bytes=vmem_limit),
    )(x_flat, stacked_table)

    return out_flat[:N, :total_dim].reshape(B, S, total_dim)


def _reference(x, tables):
    # Pure-JAX reference: per-field gather, concat on last dim.
    embs = [jnp.take(t, x[:, :, i], axis=0) for i, t in enumerate(tables)]
    return jnp.concatenate(embs, axis=-1)


if __name__ == "__main__":
    # Module config (synthetic, deterministic init — no checkpoint load).
    feature_ranges = [10, 20, 15]   # vocab sizes are range + 1
    embedding_dims = [8, 16, 8]     # concat total = 32

    key = jax.random.PRNGKey(0)
    tkeys = jax.random.split(key, len(feature_ranges) + 1)
    tables = [
        _xavier_uniform(tkeys[i], (feature_ranges[i] + 1, embedding_dims[i]))
        for i in range(len(feature_ranges))
    ]

    B, S = 2, 8
    idx_key = tkeys[-1]
    cols = []
    for i, r in enumerate(feature_ranges):
        k = jax.random.fold_in(idx_key, i)
        cols.append(jax.random.randint(k, (B, S, 1), 0, r + 1, dtype=jnp.int32))
    x = jnp.concatenate(cols, axis=-1)  # (B, S, F) int32

    # One-time setup (hoisted out of the per-call path).
    stacked, voffs, vsizes, v_pad, total_dim, d_pad = build_stacked_table(tables)

    out = link_feature_embedding(
        x, stacked,
        vocab_offsets=voffs, vocab_sizes=vsizes,
        v_pad=v_pad, total_dim=total_dim, d_pad=d_pad)
    out = jax.block_until_ready(out)

    assert out.shape == (B, S, sum(embedding_dims))

    # Exact check: each output row is exactly the bf16-rounded table row.
    tables_bf16 = [t.astype(jnp.bfloat16).astype(jnp.float32) for t in tables]
    ref_bf16 = _reference(x, tables_bf16)
    assert jnp.allclose(out, ref_bf16, atol=1e-6), "mismatch vs bf16-weight reference"

    # Loose check against the f32 reference (bf16 weight rounding only).
    ref_f32 = _reference(x, tables)
    assert jnp.allclose(out, ref_f32, atol=5e-3), "mismatch vs f32 reference"

    print("KERNEL_OK")
</pallas_src>

<mosaic_0001>
module attributes {stable_mosaic.version = 11 : i64} {
  func.func @kernel(%arg0: i32, %arg1: memref<8x3xi32, #tpu.memory_space<vmem>>, %arg2: memref<128x128xbf16, #tpu.memory_space<vmem>>, %arg3: memref<8x128xf32, #tpu.memory_space<vmem>>) attributes {dimension_semantics = [#tpu.dimension_semantics<parallel>], iteration_bounds = array<i64: 2>, scalar_prefetch = 0 : i64, scratch_operands = 0 : i64, tpu.core_type = #tpu.core_type<tc>, window_params = [{transform_indices = @transform_0, window_bounds = array<i64: 8, 3>}, {pipeline_mode = #tpu.pipeline_mode<synchronous>, transform_indices = @transform_1, window_bounds = array<i64: 128, 128>}, {transform_indices = @transform_2, window_bounds = array<i64: 8, 128>}]} {
    %0 = tpu.iota {dimensions = array<i32: 1>} : vector<8x128xi32>
    %c0 = arith.constant 0 : index
    %c0_0 = arith.constant 0 : index
    %1 = vector.load %arg1[%c0, %c0_0] : memref<8x3xi32, #tpu.memory_space<vmem>>, vector<8x1xi32>
    %c0_i32 = arith.constant 0 : i32
    %c10_i32 = arith.constant 10 : i32
    %2 = vector.broadcast %c0_i32 : i32 to vector<8x1xi32>
    %3 = arith.maxsi %2, %1 : vector<8x1xi32>
    %4 = vector.broadcast %c10_i32 : i32 to vector<8x1xi32>
    %5 = arith.minsi %4, %3 : vector<8x1xi32>
    %c0_i32_1 = arith.constant 0 : i32
    %6 = vector.broadcast %c0_i32_1 : i32 to vector<8x1xi32>
    %7 = arith.addi %5, %6 : vector<8x1xi32>
    %8 = vector.broadcast %7 : vector<8x1xi32> to vector<8x128xi32>
    %9 = arith.cmpi eq, %8, %0 : vector<8x128xi32>
    %c0_2 = arith.constant 0 : index
    %c1 = arith.constant 1 : index
    %10 = vector.load %arg1[%c0_2, %c1] : memref<8x3xi32, #tpu.memory_space<vmem>>, vector<8x1xi32>
    %c0_i32_3 = arith.constant 0 : i32
    %c20_i32 = arith.constant 20 : i32
    %11 = vector.broadcast %c0_i32_3 : i32 to vector<8x1xi32>
    %12 = arith.maxsi %11, %10 : vector<8x1xi32>
    %13 = vector.broadcast %c20_i32 : i32 to vector<8x1xi32>
    %14 = arith.minsi %13, %12 : vector<8x1xi32>
    %c11_i32 = arith.constant 11 : i32
    %15 = vector.broadcast %c11_i32 : i32 to vector<8x1xi32>
    %16 = arith.addi %14, %15 : vector<8x1xi32>
    %17 = vector.broadcast %16 : vector<8x1xi32> to vector<8x128xi32>
    %18 = arith.cmpi eq, %17, %0 : vector<8x128xi32>
    %19 = arith.ori %9, %18 : vector<8x128xi1>
    %c0_4 = arith.constant 0 : index
    %c2 = arith.constant 2 : index
    %20 = vector.load %arg1[%c0_4, %c2] : memref<8x3xi32, #tpu.memory_space<vmem>>, vector<8x1xi32>
    %c0_i32_5 = arith.constant 0 : i32
    %c15_i32 = arith.constant 15 : i32
    %21 = vector.broadcast %c0_i32_5 : i32 to vector<8x1xi32>
    %22 = arith.maxsi %21, %20 : vector<8x1xi32>
    %23 = vector.broadcast %c15_i32 : i32 to vector<8x1xi32>
    %24 = arith.minsi %23, %22 : vector<8x1xi32>
    %c32_i32 = arith.constant 32 : i32
    %25 = vector.broadcast %c32_i32 : i32 to vector<8x1xi32>
    %26 = arith.addi %24, %25 : vector<8x1xi32>
    %27 = vector.broadcast %26 : vector<8x1xi32> to vector<8x128xi32>
    %28 = arith.cmpi eq, %27, %0 : vector<8x128xi32>
    %29 = arith.ori %19, %28 : vector<8x128xi1>
    %30 = arith.extui %29 : vector<8x128xi1> to vector<8x128xi32>
    %31 = arith.sitofp %30 : vector<8x128xi32> to vector<8x128xf32>
    %32 = arith.truncf %31 : vector<8x128xf32> to vector<8x128xbf16>
    %c0_6 = arith.constant 0 : index
    %c0_7 = arith.constant 0 : index
    %33 = vector.load %arg2[%c0_6, %c0_7] : memref<128x128xbf16, #tpu.memory_space<vmem>>, vector<128x128xbf16>
    %cst = arith.constant dense<0.000000e+00> : vector<8x128xf32>
    %34 = tpu.matmul %32, %33, %cst {dimension_numbers = #tpu.dot_dimension_numbers<[1], [0], [0], [1], [0, 0, 1, 1], [], []>} : vector<8x128xbf16>, vector<128x128xbf16>, vector<8x128xf32> -> vector<8x128xf32>
    %c0_8 = arith.constant 0 : index
    %c0_9 = arith.constant 0 : index
    %35 = vector.load %arg3[%c0_8, %c0_9] : memref<8x128xf32, #tpu.memory_space<vmem>>, vector<8x128xf32>
    tpu.vector_store %arg3[%c0_8, %c0_9], %34 {strides = array<i32>} : memref<8x128xf32, #tpu.memory_space<vmem>>, vector<8x128xf32>,
    return
  }
  func.func @transform_0(%arg0: i32) -> (i32, i32) {
    %c0_i32 = arith.constant 0 : i32
    %c0_i32_0 = arith.constant 0 : i32
    return %arg0, %c0_i32 : i32, i32
  }
  func.func @transform_1(%arg0: i32) -> (i32, i32) {
    %c0_i32 = arith.constant 0 : i32
    %c0_i32_0 = arith.constant 0 : i32
    %c0_i32_1 = arith.constant 0 : i32
    return %c0_i32, %c0_i32_0 : i32, i32
  }
  func.func @transform_2(%arg0: i32) -> (i32, i32) {
    %c0_i32 = arith.constant 0 : i32
    %c0_i32_0 = arith.constant 0 : i32
    return %arg0, %c0_i32 : i32, i32
  }
}

</mosaic_0001>

<llo_original>
// kernel: link_feature_embedding.1
$region0: #{link_feature_embedding.1}
  #allocation0 [shape = 'u32[]', space=smem, size = 0x4, offset = 0x4, fixed_abs, tag = 'smem constant byte address 0x4 - core index']
  #allocation1 [shape = 'u32[144,128]{1,0:T(1,128)}', space=vmem, size = 0x12000, scoped, tag = 'internal scratch']
  %s0 = inlined_call_operand.vmem [shape: s32[16,3], index: 0, kind: input, shape index: {}]
  %s1 = inlined_call_operand.hbm [shape: bf16[128,128], index: 1, kind: input, shape index: {}]
  %s2 = inlined_call_operand.vmem [shape: f32[16,128], index: 2, kind: output, shape index: {}]
  %s3 = sld [smem:[#allocation0]]
  $region45: #{link_feature_embedding.1} parent=0
    _
  %s5 = ssub.s32 1, %s3
  %s6 = scalar_select 0, %s5, %s3
  $region1: #{link_feature_embedding.1} parent=0
    #allocation2 [shape = 'u8[32768]{0}', space=vmem, size = 0x8000, scoped, tag = 'input window, operand 1, single buffered']
    #allocation3 [shape = 's32[2]{0}', space=sflag, size = 0x8, scoped, tag = 'scoped memory for link_feature_embedding.1']
    %7 = vsyncpa [#allocation3], 0
    loop: start=0, step=1, limit=4
    $region2: #{link_feature_embedding.1} parent=1 // loop_pre_header
      _
    $region3: #{link_feature_embedding.1} parent=1 // loop_header
      %s9 = sphi 0, %s13
      %p10 = scmp.ge.s32.totalorder %s9, 4
      %s19 = sphi 0, %s21
      %s22 = sphi 0, %s19
      %s23 = sphi 0, %s22
      %s39 = sphi 0, %s23
      %s43 = sphi 0, %s43
      %s45 = sphi 0, %s43
      %s46 = sphi 0, %s45
      %s60 = sphi 0, %s46
      %s66 = sphi 0, %s68
      %s69 = sphi 0, %s66
      %s70 = sphi 0, %s69
      %s86 = sphi 0, %s70
    $region4: #{link_feature_embedding.1} parent=1 // loop_header_branch
      %12 = sbr.rel (%p10) target = $region8
    $region5: #{link_feature_embedding.1} parent=1 // loop_body
      %s14 = ssub.s32 %s9, 1
      %s15 = ssub.s32 %s9, 2
      %s16 = sadd.s32 %s9, 1
      %s17 = ssub.s32 %s9, %s16
      %p18 = scmp.eq.s32.totalorder %s17, 0
      %s20 = sadd.s32 %s19, 1
      %s21 = scalar_select %p18, %s19, %s20
      %p24 = pneg %p18
      %p25 = scmp.eq.s32.totalorder %s9, 1
      %p26 = por %p24, %p25
      %p27 = scmp.ne.s32.totalorder %s19, %s22
      %p28 = scmp.eq.s32.totalorder %s9, 0
      %p29 = por %p27, %p28
      %p30 = scmp.ne.s32.totalorder %s19, %s22
      %p31 = scmp.eq.s32.totalorder %s14, 1
      %p32 = por %p30, %p31
      %p33 = scmp.ne.s32.totalorder %s22, %s23
      %p34 = scmp.eq.s32.totalorder %s14, 0
      %p35 = por %p33, %p34
      %p36 = scmp.ne.s32.totalorder %s22, %s23
      %p37 = scmp.eq.s32.totalorder %s15, 1
      %p38 = por %p36, %p37
      %p40 = scmp.ne.s32.totalorder %s23, %s39
      %p41 = scmp.eq.s32.totalorder %s15, 0
      %p42 = por %p40, %p41
      %s44 = sadd.s32 %s43, 1
      %p47 = scmp.eq.s32.totalorder %s9, 1
      %p48 = scmp.ne.s32.totalorder %s43, %s45
      %p49 = scmp.eq.s32.totalorder %s9, 0
      %p50 = por %p48, %p49
      %p51 = scmp.ne.s32.totalorder %s43, %s45
      %p52 = scmp.eq.s32.totalorder %s14, 1
      %p53 = por %p51, %p52
      %p54 = scmp.ne.s32.totalorder %s45, %s46
      %p55 = scmp.eq.s32.totalorder %s14, 0
      %p56 = por %p54, %p55
      %p57 = scmp.ne.s32.totalorder %s45, %s46
      %p58 = scmp.eq.s32.totalorder %s15, 1
      %p59 = por %p57, %p58
      %p61 = scmp.ne.s32.totalorder %s46, %s60
      %p62 = scmp.eq.s32.totalorder %s15, 0
      %p63 = por %p61, %p62
      %s64 = ssub.s32 %s9, %s16
      %p65 = scmp.eq.s32.totalorder %s64, 0
      %s67 = sadd.s32 %s66, 1
      %s68 = scalar_select %p65, %s66, %s67
      %p71 = pneg %p65
      %p72 = scmp.eq.s32.totalorder %s9, 1
      %p73 = por %p71, %p72
      %p74 = scmp.ne.s32.totalorder %s66, %s69
      %p75 = scmp.eq.s32.totalorder %s9, 0
      %p76 = por %p74, %p75
      %p77 = scmp.ne.s32.totalorder %s66, %s69
      %p78 = scmp.eq.s32.totalorder %s14, 1
      %p79 = por %p77, %p78
      %p80 = scmp.ne.s32.totalorder %s69, %s70
      %p81 = scmp.eq.s32.totalorder %s14, 0
      %p82 = por %p80, %p81
      %p83 = scmp.ne.s32.totalorder %s69, %s70
      %p84 = scmp.eq.s32.totalorder %s15, 1
      %p85 = por %p83, %p84
      %p87 = scmp.ne.s32.totalorder %s70, %s86
      %p88 = scmp.eq.s32.totalorder %s15, 0
      %p89 = por %p87, %p88
      %p90 = scmp.le.s32.totalorder 1, %s9
      %p91 = scmp.lt.s32.totalorder %s9, 3
      %p92 = pnand %p90, %p91
      %p93 = pneg %p92
      // Predicated region
      $region9: #{link_feature_embedding.1} parent=5 // pred_check
        _
      $region10: #{link_feature_embedding.1} parent=5 // pred_check_branch
        %95 = sbr.rel (%p92) target = $region12
      $region11: #{link_feature_embedding.1} parent=5 // pred_region
        %s96 = ssub.s32 %s9, 1
        // Predicated region
        $region13: #{link_feature_embedding.1} parent=11 // pred_check
          %p97 = pneg %p56
        $region14: #{link_feature_embedding.1} parent=11 // pred_check_branch
          %99 = sbr.rel (%p97) target = $region16
        $region15: #{link_feature_embedding.1} parent=11 // pred_region
          %s101 = ssub.s32 1024, 1024
          %102 = vsyncadd [#allocation3], %s101
          %s103 = sshll.u32 [#allocation2], 4
          %s104 = int_to_ptr.vmem [resolvable:$true] %s103
          %109 = dma.hbm_to_vmem [thread:$0]  %s1, 1024, %s104, [#allocation3], 64, 64, 4
        $region16: #{link_feature_embedding.1} parent=11 // pred_fallthru
          _
      $region12: #{link_feature_embedding.1} parent=5 // pred_fallthru
        _
      %p110 = scmp.lt.s32.totalorder %s9, 2
      // Predicated region
      $region17: #{link_feature_embedding.1} parent=5 // pred_check
        %p111 = pneg %p110
      $region18: #{link_feature_embedding.1} parent=5 // pred_check_branch
        %113 = sbr.rel (%p111) target = $region20
      $region19: #{link_feature_embedding.1} parent=5 // pred_region
        // Predicated region
        $region21: #{link_feature_embedding.1} parent=19 // pred_check
          %p114 = pneg %p29
        $region22: #{link_feature_embedding.1} parent=19 // pred_check_branch
          %116 = sbr.rel (%p114) target = $region24
        $region23: #{link_feature_embedding.1} parent=19 // pred_region
          %p117 = scmp.lt.s32.totalorder %s9, 1
          %s118 = scalar_select %p117, %s9, 1
          %s119 = smul.addr %s118, 8
          %s120 = scalar_lea.vmem %s0, %s119
        $region24: #{link_feature_embedding.1} parent=19 // pred_fallthru
          _
      $region20: #{link_feature_embedding.1} parent=5 // pred_fallthru
        _
      %p121 = scmp.le.s32.totalorder 1, %s9
      %p122 = scmp.lt.s32.totalorder %s9, 3
      %p123 = pnand %p121, %p122
      %p124 = pneg %p123
      // Predicated region
      $region25: #{link_feature_embedding.1} parent=5 // pred_check
        _
      $region26: #{link_feature_embedding.1} parent=5 // pred_check_branch
        %126 = sbr.rel (%p123) target = $region28
      $region27: #{link_feature_embedding.1} parent=5 // pred_region
        %s127 = ssub.s32 %s9, 1
        // Predicated region
        $region29: #{link_feature_embedding.1} parent=27 // pred_check
          %p128 = pneg %p56
        $region30: #{link_feature_embedding.1} parent=27 // pred_check_branch
          %130 = sbr.rel (%p128) target = $region32
        $region31: #{link_feature_embedding.1} parent=27 // pred_region
          %131 = dma.done [#allocation3], 1024
        $region32: #{link_feature_embedding.1} parent=27 // pred_fallthru
          _
        %p132 = scmp.lt.s32.totalorder %s14, 1
        %s133 = scalar_select %p132, %s14, 1
        %s134 = smul.addr %s133, 8
        %s135 = scalar_lea.vmem %s0, %s134
        %p136 = pneg %p35
        %p137 = pneg %p32
        %p138 = pneg %p56
        %p139 = pneg %p53
        %p140 = pneg %p82
        %p141 = pneg %p79
        %p142 = scmp.lt.s32.totalorder %s14, 1
        %s143 = scalar_select %p142, %s14, 1
        %s144 = smul.addr %s143, 8
        %s145 = scalar_lea.vmem %s2, %s144
        %p146 = scmp.lt.s32.totalorder %s14, 1
        %s147 = scalar_select %p146, %s14, 1
        %s148 = smul.addr %s147, 8
        %s149 = scalar_lea.vmem %s0, %s148
        %p150 = scmp.lt.s32.totalorder %s14, 1
        %s151 = scalar_select %p150, %s14, 1
        %s152 = smul.addr %s151, 8
        %s153 = scalar_lea.vmem %s2, %s152
        %v155 = vlaneseq
        %v156 = vand.u32 %v155, 127
        %v157 = vld [vmem:[%s149] sm:$0xff]
        %vm158 = vcmp.gt.s32.totalorder %v157, 0
        %v159 = vsel %vm158, %v157, 0
        %vm160 = vcmp.lt.s32.totalorder %v159, 10
        %v161 = vsel %vm160, %v159, 10
        %162 = vset.pattern.permute.xlu0 0
        %163 = vperm.xlu0 %162, %v161
        %v164 = vpop.permute.xlu0 %163
        %vm165 = vcmp.eq.s32.totalorder %v164, %v156
        %vm166 = vcmp.lt.s32.totalorder %v159, 20
        %v167 = vsel %vm166, %v159, 20
        %v168 = vadd.s32 %v167, 11
        %169 = vset.pattern.permute.xlu0 1
        %170 = vperm.xlu0 %169, %v168
        %v171 = vpop.permute.xlu0 %170
        %vm172 = vcmp.eq.s32.totalorder %v171, %v156
        %vm173 = vmor %vm165, %vm172
        %vm174 = vcmp.lt.s32.totalorder %v159, 15
        %v175 = vsel %vm174, %v159, 15
        %v176 = vadd.s32 %v175, 32
        %177 = vset.pattern.permute.xlu0 2
        %178 = vperm.xlu0 %177, %v176
        %v179 = vpop.permute.xlu0 %178
        %vm180 = vcmp.eq.s32.totalorder %v179, %v156
        %vm181 = vmor %vm173, %vm180
        %v182 = vsel %vm181, 1, 0
        %v183 = vcvt.s32.f32 %v182
        %v184 = vpack.c.bf16 %v183, %v183
        %v185 = vld [vmem:[#allocation2] sm:$0xf]
        %v186 = vld [vmem:[#allocation2 + $0x4] sm:$0xf]
        %v187 = vld [vmem:[#allocation2 + $0x8] sm:$0xf]
        %v188 = vld [vmem:[#allocation2 + $0xc] sm:$0xf]
        %v189 = vld [vmem:[#allocation2 + $0x10] sm:$0xf]
        %v190 = vld [vmem:[#allocation2 + $0x14] sm:$0xf]
        %v191 = vld [vmem:[#allocation2 + $0x18] sm:$0xf]
        %v192 = vld [vmem:[#allocation2 + $0x1c] sm:$0xf]
        %v193 = vld [vmem:[#allocation2 + $0x20] sm:$0xf]
        %v194 = vld [vmem:[#allocation2 + $0x24] sm:$0xf]
        %v195 = vld [vmem:[#allocation2 + $0x28] sm:$0xf]
        %v196 = vld [vmem:[#allocation2 + $0x2c] sm:$0xf]
        %v197 = vld [vmem:[#allocation2 + $0x30] sm:$0xf]
        %v198 = vld [vmem:[#allocation2 + $0x34] sm:$0xf]
        %v199 = vld [vmem:[#allocation2 + $0x38] sm:$0xf]
        %v200 = vld [vmem:[#allocation2 + $0x3c] sm:$0xf]
        %v217 = vunpack.c.l.b16 %v185
        %v218 = vunpack.c.l.b16 %v186
        %v219 = vunpack.c.l.b16 %v187
        %v220 = vunpack.c.l.b16 %v188
        %v221 = vunpack.c.l.b16 %v189
        %v222 = vunpack.c.l.b16 %v190
        %v223 = vunpack.c.l.b16 %v191
        %v224 = vunpack.c.l.b16 %v192
        %v225 = vunpack.c.l.b16 %v193
        %v226 = vunpack.c.l.b16 %v194
        %v227 = vunpack.c.l.b16 %v195
        %v228 = vunpack.c.l.b16 %v196
        %v229 = vunpack.c.l.b16 %v197
        %v230 = vunpack.c.l.b16 %v198
        %v231 = vunpack.c.l.b16 %v199
        %v232 = vunpack.c.l.b16 %v200
        %v233 = vpack.c.b16 %v218, %v217
        %v234 = vpack.c.b16 %v220, %v219
        %v235 = vpack.c.b16 %v222, %v221
        %v236 = vpack.c.b16 %v224, %v223
        %v237 = vpack.c.b16 %v226, %v225
        %v238 = vpack.c.b16 %v228, %v227
        %v239 = vpack.c.b16 %v230, %v229
        %v240 = vpack.c.b16 %v232, %v231
        %249 = vmatprep.subr.bf16.mxu0 0
        %250 = vmatpush1.bf16.msra.mxu0 %v240
        %251 = vmatprep.subr.bf16.mxu0 0
        %252 = vmatpush1.bf16.msra.mxu0 %v239
        %253 = vmatprep.subr.bf16.mxu0 0
        %254 = vmatpush1.bf16.msra.mxu0 %v238
        %255 = vmatprep.subr.bf16.mxu0 0
        %256 = vmatpush1.bf16.msra.mxu0 %v237
        %257 = vmatprep.subr.bf16.mxu0 0
        %258 = vmatpush1.bf16.msra.mxu0 %v236
        %259 = vmatprep.subr.bf16.mxu0 0
        %260 = vmatpush1.bf16.msra.mxu0 %v235
        %261 = vmatprep.subr.bf16.mxu0 0
        %262 = vmatpush1.bf16.msra.mxu0 %v234
        %263 = vmatprep.subr.bf16.mxu0 0
        %264 = vmatpush1.bf16.msra.mxu0 %v233
        %265 = vmatprep.subr.bf16.mxu0 0
        %266 = vmatpush2.bf16.msra.mxu0 0
        %267 = vmatprep.subr.bf16.mxu0 0
        %268 = vmatpush2.bf16.msra.mxu0 0
        %269 = vmatprep.subr.bf16.mxu0 0
        %270 = vmatpush2.bf16.msra.mxu0 0
        %271 = vmatprep.subr.bf16.mxu0 0
        %272 = vmatpush2.bf16.msra.mxu0 0
        %273 = vmatprep.subr.bf16.mxu0 0
        %274 = vmatpush2.bf16.msra.mxu0 0
        %275 = vmatprep.subr.bf16.mxu0 0
        %276 = vmatpush2.bf16.msra.mxu0 0
        %277 = vmatprep.subr.bf16.mxu0 0
        %278 = vmatpush2.bf16.msra.mxu0 0
        %279 = vmatprep.subr.bf16.mxu0 0
        %280 = vmatpush2.bf16.msra.mxu0 0
        %281 = vmatprep.mubr.bf16.mxu0 0
        %282 = vmatmul.mubr.bf16.gmra.mxu0 %v184
        %v283 = vpop.f32.mrf.mxu0
        %v284 = vadd.f32 0.0, %v283
        %v285 = vpop.f32.mrf.mxu0
        %v286 = vpop.f32.mrf.mxu0
        %v287 = vpop.f32.mrf.mxu0
        %288 = vdwg.mxu0
        %289 = vst [vmem:[%s153] sm:$0xff] %v284
        %p290 = scmp.lt.s32.totalorder %s14, 1
        %s291 = scalar_select %p290, %s14, 1
        %s292 = smul.addr %s291, 8
        %s293 = scalar_lea.vmem %s2, %s292
        // Predicated region
        $region33: #{link_feature_embedding.1} parent=27 // pred_check
          %p294 = pneg %p79
        $region34: #{link_feature_embedding.1} parent=27 // pred_check_branch
          %296 = sbr.rel (%p294) target = $region36
        $region35: #{link_feature_embedding.1} parent=27 // pred_region
          _
        $region36: #{link_feature_embedding.1} parent=27 // pred_fallthru
          _
      $region28: #{link_feature_embedding.1} parent=5 // pred_fallthru
        _
      %p297 = scmp.le.s32.totalorder 2, %s9
      // Predicated region
      $region37: #{link_feature_embedding.1} parent=5 // pred_check
        %p298 = pneg %p297
      $region38: #{link_feature_embedding.1} parent=5 // pred_check_branch
        %300 = sbr.rel (%p298) target = $region40
      $region39: #{link_feature_embedding.1} parent=5 // pred_region
        %s301 = ssub.s32 %s9, 2
        // Predicated region
        $region41: #{link_feature_embedding.1} parent=39 // pred_check
          %p302 = pneg %p85
        $region42: #{link_feature_embedding.1} parent=39 // pred_check_branch
          %304 = sbr.rel (%p302) target = $region44
        $region43: #{link_feature_embedding.1} parent=39 // pred_region
          %p305 = scmp.lt.s32.totalorder %s15, 1
          %s306 = scalar_select %p305, %s15, 1
          %s307 = smul.addr %s306, 8
          %s308 = scalar_lea.vmem %s2, %s307
        $region44: #{link_feature_embedding.1} parent=39 // pred_fallthru
          _
      $region40: #{link_feature_embedding.1} parent=5 // pred_fallthru
        _
    $region6: #{link_feature_embedding.1} parent=1 // loop_footer
      %s13 = sadd.s32 1, %s9
    $region7: #{link_feature_embedding.1} parent=1 // loop_footer_branch
      %8 = sbr.rel target = $region3
    $region8: #{link_feature_embedding.1} parent=1 // loop_exit
      _
    %309 = vsyncpa [#allocation3], 1
    %s310 = scalar_lea.sflag [#allocation3], 1
    %311 = vsyncpa %s310, 1

</llo_original>
